<compile_context>
chip_gen: v7x
topology: tpu7x:2x2x1
jax: 0.10.0
libtpu: 0.0.40
codegen_flags: <defaults>
</compile_context>

<pallas_src>
import functools

import jax
import jax.numpy as jnp
from jax import lax
from jax.experimental import pallas as pl
from jax.experimental.pallas import tpu as pltpu

BN_EPS = 1e-5
LEAKY_SLOPE = 0.01


def _conv_stats_kernel(cols_ref, w_ref, conv_ref, stats_ref):
    """Pass 1: conv-as-matmul on the MXU + per-channel sum / sumsq accumulation."""
    @pl.when(pl.program_id(0) == 0)
    def _init():
        stats_ref[...] = jnp.zeros_like(stats_ref)

    # (TILE_M, K) @ (K, Cout) -> f32 (TILE_M, Cout); bf16 operands, f32 accumulate.
    acc = jnp.dot(cols_ref[...], w_ref[...], preferred_element_type=jnp.float32)
    conv_ref[...] = acc

    # Per-tile partial reduction, added into the resident (2, Cout) accumulator.
    psum = jnp.sum(acc, axis=0, keepdims=True)
    psumsq = jnp.sum(acc * acc, axis=0, keepdims=True)
    stats_ref[...] = stats_ref[...] + jnp.concatenate([psum, psumsq], axis=0)


def _bn_lrelu_kernel(conv_ref, stats_ref, gamma_ref, beta_ref, out_ref, *, inv_m):
    """Pass 2: normalize with global batch stats + affine + LeakyReLU (lane-dense)."""
    x = conv_ref[...]                              # (TILE_R, Wo*Cout) f32
    s = stats_ref[...]                             # (2, Wo*Cout): [sum; sumsq] tiled over Wo
    mean = s[0:1, :] * inv_m
    var = jnp.maximum(s[1:2, :] * inv_m - mean * mean, 0.0)   # biased batch variance
    inv_std = lax.rsqrt(var + BN_EPS)
    y = (x - mean) * (inv_std * gamma_ref[...]) + beta_ref[...]
    out_ref[...] = jnp.where(y > 0, y, LEAKY_SLOPE * y).astype(out_ref.dtype)


def _pick_tile_rows(rows, wo, max_tile_m):
    """Rows of the (N*Ho, Wo*Cout) view per grid step (TILE_M = tile_rows * Wo)."""
    cap = max(1, max_tile_m // wo)
    for cand in range(min(cap, rows), 0, -1):
        if rows % cand != 0:
            continue
        tile_m = cand * wo
        if (cand % 8 == 0 or cand == rows) and (tile_m % 16 == 0 or cand == rows):
            return cand
    return rows  # fallback: full extent in one block (always a legal block shape)


def conv_block_forward(x_nchw, weight, bias, gamma, beta, *, max_tile_m=1024):
    """x_nchw: (N, Cin, H, W); weight: (Cout, Cin, 3, 3); bias/gamma/beta: (Cout,).

    max_tile_m caps the number of im2col rows per grid step.  Guidance: ~1024-2048
    on v5e/v6e (128 MiB VMEM, lower HBM BW), roughly half that on v7x (64 MiB VMEM).
    """
    del bias  # Conv bias cancels exactly under training-mode BatchNorm (see header).
    n, cin, h, w = x_nchw.shape
    cout = weight.shape[0]
    ho = (h + 2 - 3) // 2 + 1
    wo = (w + 2 - 3) // 2 + 1

    # ---- wrapper-side layout plumbing (XLA): NCHW -> NHWC, pad, im2col, bf16 ----
    x_nhwc = jnp.transpose(x_nchw, (0, 2, 3, 1))
    x_pad = jnp.pad(x_nhwc, ((0, 0), (1, 1), (1, 1), (0, 0)))
    patches = []
    for ky in range(3):
        for kx in range(3):
            patches.append(x_pad[:, ky:ky + 2 * ho - 1:2, kx:kx + 2 * wo - 1:2, :])
    cols = jnp.concatenate(patches, axis=-1).reshape(n * ho * wo, 9 * cin)
    cols = cols.astype(jnp.bfloat16)               # halve MXU-input DMA bytes

    # (Cout, Cin, 3, 3) -> (3, 3, Cin, Cout) -> (9*Cin, Cout), matching tap order.
    w_mat = jnp.transpose(weight, (2, 3, 1, 0)).reshape(9 * cin, cout).astype(jnp.bfloat16)

    m = n * ho * wo
    k = 9 * cin
    rows = n * ho                                   # rows of the lane-dense output view
    lanes = wo * cout

    tile_rows = _pick_tile_rows(rows, wo, max_tile_m)
    tile_m = tile_rows * wo
    num_tiles = rows // tile_rows                   # == m // tile_m

    # ------------------------- pass 1: conv + batch stats -------------------------
    conv_flat, stats = pl.pallas_call(
        _conv_stats_kernel,
        out_shape=(
            jax.ShapeDtypeStruct((m, cout), jnp.float32),   # raw conv output
            jax.ShapeDtypeStruct((2, cout), jnp.float32),   # [sum; sumsq] per channel
        ),
        grid=(num_tiles,),
        in_specs=[
            pl.BlockSpec((tile_m, k), lambda i: (i, 0)),    # streamed cols tiles
            pl.BlockSpec((k, cout), lambda i: (0, 0)),      # resident weights
        ],
        out_specs=(
            pl.BlockSpec((tile_m, cout), lambda i: (i, 0)),
            pl.BlockSpec((2, cout), lambda i: (0, 0)),      # resident accumulator
        ),
        compiler_params=pltpu.CompilerParams(
            # Stats accumulate across M tiles -> reduction axis must be "arbitrary".
            dimension_semantics=("arbitrary",),
            vmem_limit_bytes=32 * 1024 * 1024,
        ),
        cost_estimate=pl.CostEstimate(
            flops=2 * m * k * cout,
            transcendentals=0,
            bytes_accessed=cols.size * 2 + w_mat.size * 2 + m * cout * 4 + 2 * cout * 4,
        ),
    )(cols, w_mat)

    # ------------- pass 2: BN + LeakyReLU on a lane-dense view of the conv --------
    conv_dense = conv_flat.reshape(rows, lanes)            # same row-major buffer, free
    stats_t = jnp.tile(stats, (1, wo))                     # (2, Wo*Cout)
    gamma_t = jnp.tile(gamma.reshape(1, cout), (1, wo))    # (1, Wo*Cout)
    beta_t = jnp.tile(beta.reshape(1, cout), (1, wo))      # (1, Wo*Cout)

    out_dense = pl.pallas_call(
        functools.partial(_bn_lrelu_kernel, inv_m=1.0 / float(m)),
        out_shape=jax.ShapeDtypeStruct((rows, lanes), jnp.float32),
        grid=(num_tiles,),
        in_specs=[
            pl.BlockSpec((tile_rows, lanes), lambda i: (i, 0)),
            pl.BlockSpec((2, lanes), lambda i: (0, 0)),
            pl.BlockSpec((1, lanes), lambda i: (0, 0)),
            pl.BlockSpec((1, lanes), lambda i: (0, 0)),
        ],
        out_specs=pl.BlockSpec((tile_rows, lanes), lambda i: (i, 0)),
        compiler_params=pltpu.CompilerParams(
            dimension_semantics=("parallel",),              # shardable across v7x TCs
            vmem_limit_bytes=32 * 1024 * 1024,
        ),
        cost_estimate=pl.CostEstimate(
            flops=8 * rows * lanes,
            transcendentals=num_tiles * lanes,
            bytes_accessed=2 * rows * lanes * 4 + 4 * lanes * 4,
        ),
    )(conv_dense, stats_t, gamma_t, beta_t)

    # (N*Ho, Wo*Cout) -> (N, Ho, Wo, Cout) -> NCHW to match torch's output convention.
    out = out_dense.reshape(n, ho, wo, cout).transpose(0, 3, 1, 2)
    return out


if __name__ == "__main__":
    key = jax.random.PRNGKey(0)
    N, CIN, H, W = 2, 4, 16, 16
    COUT = 8

    k_x, k_w, k_b, k_g, k_be = jax.random.split(key, 5)
    x = jax.random.normal(k_x, (N, CIN, H, W), dtype=jnp.float32)
    weight = 0.1 * jax.random.normal(k_w, (COUT, CIN, 3, 3), dtype=jnp.float32)
    bias = 0.1 * jax.random.normal(k_b, (COUT,), dtype=jnp.float32)
    gamma = 1.0 + 0.1 * jax.random.normal(k_g, (COUT,), dtype=jnp.float32)
    beta = 0.1 * jax.random.normal(k_be, (COUT,), dtype=jnp.float32)

    # max_tile_m=64 -> 2 grid steps at these toy shapes (exercises the streamed
    # stats accumulation path); the default 1024 is the v5e/v6e production setting.
    out = conv_block_forward(x, weight, bias, gamma, beta, max_tile_m=64)
    jax.block_until_ready(out)
    assert out.shape == (N, COUT, H // 2, W // 2)
    assert bool(jnp.all(jnp.isfinite(out)))
    print("KERNEL_OK")
</pallas_src>

<mosaic_0001>
module attributes {stable_mosaic.version = 11 : i64} {
  func.func @_conv_stats_kernel(%arg0: i32, %arg1: memref<64x36xbf16, #tpu.memory_space<vmem>>, %arg2: memref<36x8xbf16, #tpu.memory_space<vmem>>, %arg3: memref<64x8xf32, #tpu.memory_space<vmem>>, %arg4: memref<2x8xf32, #tpu.memory_space<vmem>>) attributes {dimension_semantics = [#tpu.dimension_semantics<arbitrary>], iteration_bounds = array<i64: 2>, scalar_prefetch = 0 : i64, scratch_operands = 0 : i64, tpu.core_type = #tpu.core_type<tc>, window_params = [{transform_indices = @transform_0, window_bounds = array<i64: 64, 36>}, {pipeline_mode = #tpu.pipeline_mode<synchronous>, transform_indices = @transform_1, window_bounds = array<i64: 36, 8>}, {transform_indices = @transform_2, window_bounds = array<i64: 64, 8>}, {pipeline_mode = #tpu.pipeline_mode<synchronous>, transform_indices = @transform_3, window_bounds = array<i64: 2, 8>}]} {
    %c0_i32 = arith.constant 0 : i32
    %0 = arith.cmpi eq, %arg0, %c0_i32 : i32
    %1 = arith.extui %0 : i1 to i32
    %c0_i32_0 = arith.constant 0 : i32
    %2 = arith.cmpi ne, %1, %c0_i32_0 : i32
    scf.if %2 {
      %cst_12 = arith.constant 0.000000e+00 : f32
      %16 = vector.broadcast %cst_12 : f32 to vector<2x8xf32>
      %c0_13 = arith.constant 0 : index
      %c0_14 = arith.constant 0 : index
      %17 = vector.load %arg4[%c0_13, %c0_14] : memref<2x8xf32, #tpu.memory_space<vmem>>, vector<2x8xf32>
      tpu.vector_store %arg4[%c0_13, %c0_14], %16 {strides = array<i32>} : memref<2x8xf32, #tpu.memory_space<vmem>>, vector<2x8xf32>,
    } else {
    }
    %c0 = arith.constant 0 : index
    %c0_1 = arith.constant 0 : index
    %3 = vector.load %arg1[%c0, %c0_1] : memref<64x36xbf16, #tpu.memory_space<vmem>>, vector<64x36xbf16>
    %c0_2 = arith.constant 0 : index
    %c0_3 = arith.constant 0 : index
    %4 = vector.load %arg2[%c0_2, %c0_3] : memref<36x8xbf16, #tpu.memory_space<vmem>>, vector<36x8xbf16>
    %cst = arith.constant dense<0.000000e+00> : vector<64x8xf32>
    %5 = tpu.matmul %3, %4, %cst {dimension_numbers = #tpu.dot_dimension_numbers<[1], [0], [0], [1], [0, 0, 1, 1], [], []>} : vector<64x36xbf16>, vector<36x8xbf16>, vector<64x8xf32> -> vector<64x8xf32>
    %c0_4 = arith.constant 0 : index
    %c0_5 = arith.constant 0 : index
    %6 = vector.load %arg3[%c0_4, %c0_5] : memref<64x8xf32, #tpu.memory_space<vmem>>, vector<64x8xf32>
    tpu.vector_store %arg3[%c0_4, %c0_5], %5 {strides = array<i32>} : memref<64x8xf32, #tpu.memory_space<vmem>>, vector<64x8xf32>,
    %cst_6 = arith.constant dense<0.000000e+00> : vector<8xf32>
    %7 = vector.multi_reduction <add>, %5, %cst_6 [0] : vector<64x8xf32> to vector<8xf32>
    %8 = vector.shape_cast %7 : vector<8xf32> to vector<1x8xf32>
    %9 = arith.mulf %5, %5 : vector<64x8xf32>
    %cst_7 = arith.constant dense<0.000000e+00> : vector<8xf32>
    %10 = vector.multi_reduction <add>, %9, %cst_7 [0] : vector<64x8xf32> to vector<8xf32>
    %11 = vector.shape_cast %10 : vector<8xf32> to vector<1x8xf32>
    %c0_8 = arith.constant 0 : index
    %c0_9 = arith.constant 0 : index
    %12 = vector.load %arg4[%c0_8, %c0_9] : memref<2x8xf32, #tpu.memory_space<vmem>>, vector<2x8xf32>
    %13 = tpu.concatenate %8, %11 in 0 : vector<1x8xf32>, vector<1x8xf32> -> vector<2x8xf32>
    %14 = arith.addf %12, %13 : vector<2x8xf32>
    %c0_10 = arith.constant 0 : index
    %c0_11 = arith.constant 0 : index
    %15 = vector.load %arg4[%c0_10, %c0_11] : memref<2x8xf32, #tpu.memory_space<vmem>>, vector<2x8xf32>
    tpu.vector_store %arg4[%c0_10, %c0_11], %14 {strides = array<i32>} : memref<2x8xf32, #tpu.memory_space<vmem>>, vector<2x8xf32>,
    return
  }
  func.func @transform_0(%arg0: i32) -> (i32, i32) {
    %c0_i32 = arith.constant 0 : i32
    %c0_i32_0 = arith.constant 0 : i32
    return %arg0, %c0_i32 : i32, i32
  }
  func.func @transform_1(%arg0: i32) -> (i32, i32) {
    %c0_i32 = arith.constant 0 : i32
    %c0_i32_0 = arith.constant 0 : i32
    %c0_i32_1 = arith.constant 0 : i32
    return %c0_i32, %c0_i32_0 : i32, i32
  }
  func.func @transform_2(%arg0: i32) -> (i32, i32) {
    %c0_i32 = arith.constant 0 : i32
    %c0_i32_0 = arith.constant 0 : i32
    return %arg0, %c0_i32 : i32, i32
  }
  func.func @transform_3(%arg0: i32) -> (i32, i32) {
    %c0_i32 = arith.constant 0 : i32
    %c0_i32_0 = arith.constant 0 : i32
    %c0_i32_1 = arith.constant 0 : i32
    return %c0_i32, %c0_i32_0 : i32, i32
  }
}

</mosaic_0001>

<llo_original>
// kernel: tpu_custom_call.1
$region0: #{tpu_custom_call.1}
  #allocation0 [shape = 'u32[]', space=smem, size = 0x4, offset = 0x4, fixed_abs, tag = 'smem constant byte address 0x4 - core index']
  #allocation1 [shape = 'u32[144,128]{1,0:T(1,128)}', space=vmem, size = 0x12000, scoped, tag = 'internal scratch']
  %s0 = inlined_call_operand.vmem [shape: bf16[128,36], index: 0, kind: input, shape index: {}]
  %s1 = inlined_call_operand.vmem [shape: bf16[36,8], index: 1, kind: input, shape index: {}]
  %s2 = inlined_call_operand.vmem [shape: f32[128,8], index: 2, kind: output, shape index: {0}]
  %s3 = inlined_call_operand.hbm [shape: f32[2,8], index: 3, kind: output, shape index: {1}]
  %4 = xla_tuple %s2, %s3
  %s5 = sld [smem:[#allocation0]]
  $region53: #{tpu_custom_call.1} parent=0
    _
  %s7 = ssub.s32 1, %s5
  %s8 = scalar_select 0, %s7, %s5
  $region1: #{tpu_custom_call.1} parent=0
    #allocation2 [shape = 'u8[1024]{0}', space=vmem, size = 0x400, scoped, tag = 'output window, operand 1, single buffered']
    #allocation3 [shape = 's32[2]{0}', space=sflag, size = 0x8, scoped, tag = 'scoped memory for tpu_custom_call.1']
    %9 = vsyncpa [#allocation3], 0
    loop: start=0, step=1, limit=4
    $region2: #{tpu_custom_call.1} parent=1 // loop_pre_header
      _
    $region3: #{tpu_custom_call.1} parent=1 // loop_header
      %s11 = sphi 0, %s15
      %p12 = scmp.ge.s32.totalorder %s11, 4
      %s21 = sphi 0, %s23
      %s24 = sphi 0, %s21
      %s25 = sphi 0, %s24
      %s41 = sphi 0, %s25
      %s45 = sphi 0, %s45
      %s47 = sphi 0, %s45
      %s48 = sphi 0, %s47
      %s62 = sphi 0, %s48
      %s68 = sphi 0, %s70
      %s71 = sphi 0, %s68
      %s72 = sphi 0, %s71
      %s88 = sphi 0, %s72
      %s92 = sphi 0, %s92
      %s94 = sphi 0, %s92
      %s95 = sphi 0, %s94
      %s109 = sphi 0, %s95
    $region4: #{tpu_custom_call.1} parent=1 // loop_header_branch
      %14 = sbr.rel (%p12) target = $region8
    $region5: #{tpu_custom_call.1} parent=1 // loop_body
      %s16 = ssub.s32 %s11, 1
      %s17 = ssub.s32 %s11, 2
      %s18 = sadd.s32 %s11, 1
      %s19 = ssub.s32 %s11, %s18
      %p20 = scmp.eq.s32.totalorder %s19, 0
      %s22 = sadd.s32 %s21, 1
      %s23 = scalar_select %p20, %s21, %s22
      %p26 = pneg %p20
      %p27 = scmp.eq.s32.totalorder %s11, 1
      %p28 = por %p26, %p27
      %p29 = scmp.ne.s32.totalorder %s21, %s24
      %p30 = scmp.eq.s32.totalorder %s11, 0
      %p31 = por %p29, %p30
      %p32 = scmp.ne.s32.totalorder %s21, %s24
      %p33 = scmp.eq.s32.totalorder %s16, 1
      %p34 = por %p32, %p33
      %p35 = scmp.ne.s32.totalorder %s24, %s25
      %p36 = scmp.eq.s32.totalorder %s16, 0
      %p37 = por %p35, %p36
      %p38 = scmp.ne.s32.totalorder %s24, %s25
      %p39 = scmp.eq.s32.totalorder %s17, 1
      %p40 = por %p38, %p39
      %p42 = scmp.ne.s32.totalorder %s25, %s41
      %p43 = scmp.eq.s32.totalorder %s17, 0
      %p44 = por %p42, %p43
      %s46 = sadd.s32 %s45, 1
      %p49 = scmp.eq.s32.totalorder %s11, 1
      %p50 = scmp.ne.s32.totalorder %s45, %s47
      %p51 = scmp.eq.s32.totalorder %s11, 0
      %p52 = por %p50, %p51
      %p53 = scmp.ne.s32.totalorder %s45, %s47
      %p54 = scmp.eq.s32.totalorder %s16, 1
      %p55 = por %p53, %p54
      %p56 = scmp.ne.s32.totalorder %s47, %s48
      %p57 = scmp.eq.s32.totalorder %s16, 0
      %p58 = por %p56, %p57
      %p59 = scmp.ne.s32.totalorder %s47, %s48
      %p60 = scmp.eq.s32.totalorder %s17, 1
      %p61 = por %p59, %p60
      %p63 = scmp.ne.s32.totalorder %s48, %s62
      %p64 = scmp.eq.s32.totalorder %s17, 0
      %p65 = por %p63, %p64
      %s66 = ssub.s32 %s11, %s18
      %p67 = scmp.eq.s32.totalorder %s66, 0
      %s69 = sadd.s32 %s68, 1
      %s70 = scalar_select %p67, %s68, %s69
      %p73 = pneg %p67
      %p74 = scmp.eq.s32.totalorder %s11, 1
      %p75 = por %p73, %p74
      %p76 = scmp.ne.s32.totalorder %s68, %s71
      %p77 = scmp.eq.s32.totalorder %s11, 0
      %p78 = por %p76, %p77
      %p79 = scmp.ne.s32.totalorder %s68, %s71
      %p80 = scmp.eq.s32.totalorder %s16, 1
      %p81 = por %p79, %p80
      %p82 = scmp.ne.s32.totalorder %s71, %s72
      %p83 = scmp.eq.s32.totalorder %s16, 0
      %p84 = por %p82, %p83
      %p85 = scmp.ne.s32.totalorder %s71, %s72
      %p86 = scmp.eq.s32.totalorder %s17, 1
      %p87 = por %p85, %p86
      %p89 = scmp.ne.s32.totalorder %s72, %s88
      %p90 = scmp.eq.s32.totalorder %s17, 0
      %p91 = por %p89, %p90
      %s93 = sadd.s32 %s92, 1
      %p96 = scmp.eq.s32.totalorder %s11, 1
      %p97 = scmp.ne.s32.totalorder %s92, %s94
      %p98 = scmp.eq.s32.totalorder %s11, 0
      %p99 = por %p97, %p98
      %p100 = scmp.ne.s32.totalorder %s92, %s94
      %p101 = scmp.eq.s32.totalorder %s16, 1
      %p102 = por %p100, %p101
      %p103 = scmp.ne.s32.totalorder %s94, %s95
      %p104 = scmp.eq.s32.totalorder %s16, 0
      %p105 = por %p103, %p104
      %p106 = scmp.ne.s32.totalorder %s94, %s95
      %p107 = scmp.eq.s32.totalorder %s17, 1
      %p108 = por %p106, %p107
      %p110 = scmp.ne.s32.totalorder %s95, %s109
      %p111 = scmp.eq.s32.totalorder %s17, 0
      %p112 = por %p110, %p111
      %p113 = scmp.le.s32.totalorder 1, %s11
      %p114 = scmp.lt.s32.totalorder %s11, 3
      %p115 = pnand %p113, %p114
      %p116 = pneg %p115
      // Predicated region
      $region9: #{tpu_custom_call.1} parent=5 // pred_check
        _
      $region10: #{tpu_custom_call.1} parent=5 // pred_check_branch
        %118 = sbr.rel (%p115) target = $region12
      $region11: #{tpu_custom_call.1} parent=5 // pred_region
        %s119 = ssub.s32 %s11, 1
        // Predicated region
        $region13: #{tpu_custom_call.1} parent=11 // pred_check
          %p120 = pneg %p58
        $region14: #{tpu_custom_call.1} parent=11 // pred_check_branch
          %122 = sbr.rel (%p120) target = $region16
        $region15: #{tpu_custom_call.1} parent=11 // pred_region
          _
        $region16: #{tpu_custom_call.1} parent=11 // pred_fallthru
          _
      $region12: #{tpu_custom_call.1} parent=5 // pred_fallthru
        _
      %p123 = scmp.lt.s32.totalorder %s11, 2
      // Predicated region
      $region17: #{tpu_custom_call.1} parent=5 // pred_check
        %p124 = pneg %p123
      $region18: #{tpu_custom_call.1} parent=5 // pred_check_branch
        %126 = sbr.rel (%p124) target = $region20
      $region19: #{tpu_custom_call.1} parent=5 // pred_region
        // Predicated region
        $region21: #{tpu_custom_call.1} parent=19 // pred_check
          %p127 = pneg %p31
        $region22: #{tpu_custom_call.1} parent=19 // pred_check_branch
          %129 = sbr.rel (%p127) target = $region24
        $region23: #{tpu_custom_call.1} parent=19 // pred_region
          %s130 = smul.u32 8, %s11
          %p131 = scmp.lt.s32.totalorder %s130, 15
          %s132 = scalar_select %p131, %s130, 15
          %s133 = smul.addr %s132, 4
          %s134 = scalar_lea.vmem %s0, %s133
          %s135 = smul.u32 8, %s11
        $region24: #{tpu_custom_call.1} parent=19 // pred_fallthru
          _
      $region20: #{tpu_custom_call.1} parent=5 // pred_fallthru
        _
      %p136 = scmp.le.s32.totalorder 1, %s11
      %p137 = scmp.lt.s32.totalorder %s11, 3
      %p138 = pnand %p136, %p137
      %p139 = pneg %p138
      // Predicated region
      $region25: #{tpu_custom_call.1} parent=5 // pred_check
        _
      $region26: #{tpu_custom_call.1} parent=5 // pred_check_branch
        %141 = sbr.rel (%p138) target = $region28
      $region27: #{tpu_custom_call.1} parent=5 // pred_region
        %s142 = ssub.s32 %s11, 1
        %s143 = smul.u32 8, %s16
        %p144 = scmp.lt.s32.totalorder %s143, 15
        %s145 = scalar_select %p144, %s143, 15
        %s146 = smul.addr %s145, 4
        %s147 = scalar_lea.vmem %s0, %s146
        %p148 = pneg %p37
        %p149 = pneg %p34
        %p150 = pneg %p58
        %p151 = pneg %p55
        %p152 = pneg %p84
        %p153 = pneg %p81
        %s154 = smul.u32 8, %s16
        %p155 = scmp.lt.s32.totalorder %s154, 15
        %s156 = scalar_select %p155, %s154, 15
        %s157 = smul.addr %s156, 8
        %s158 = scalar_lea.vmem %s2, %s157
        %p159 = pneg %p105
        %p160 = pneg %p102
        %s161 = smul.u32 8, %s16
        %p162 = scmp.lt.s32.totalorder %s161, 15
        %s163 = scalar_select %p162, %s161, 15
        %s164 = smul.addr %s163, 4
        %s165 = scalar_lea.vmem %s0, %s164
        %s166 = smul.u32 8, %s16
        %s167 = smul.u32 8, %s16
        %p168 = scmp.lt.s32.totalorder %s167, 15
        %s169 = scalar_select %p168, %s167, 15
        %s170 = smul.addr %s169, 8
        %s171 = scalar_lea.vmem %s2, %s170
        %s172 = smul.u32 8, %s16
        %p174 = scmp.eq.s32.totalorder %s16, 0
        // Predicated region
        $region29: #{tpu_custom_call.1} parent=27 // pred_check
          %p175 = pneg %p174
        $region30: #{tpu_custom_call.1} parent=27 // pred_check_branch
          %177 = sbr.rel (%p175) target = $region32
        $region31: #{tpu_custom_call.1} parent=27 // pred_region
          %vm178 = vcmask 58368
          %179 = vst.msk [vmem:[#allocation2] sm:$0x3] %vm178, 0.0
        $region32: #{tpu_custom_call.1} parent=27 // pred_fallthru
          _
        %v180 = vld [vmem:[%s165] sm:$0xf]
        %v181 = vld [vmem:[%s165 + $0x4] sm:$0xf]
        %v182 = vld [vmem:[%s165 + $0x8] sm:$0xf]
        %v183 = vld [vmem:[%s165 + $0xc] sm:$0xf]
        %v184 = vld [vmem:[%s165 + $0x10] sm:$0xf]
        %v185 = vld [vmem:[%s165 + $0x14] sm:$0xf]
        %v186 = vld [vmem:[%s165 + $0x18] sm:$0xf]
        %v187 = vld [vmem:[%s165 + $0x1c] sm:$0xf]
        %v188 = vld [vmem:[%s1] sm:$0xf]
        %v189 = vld [vmem:[%s1 + $0x4] sm:$0xf]
        %v190 = vld [vmem:[%s1 + $0x8] sm:$0xf]
        %v191 = vld [vmem:[%s1 + $0xc] sm:$0xf]
        %v192 = vld [vmem:[%s1 + $0x10] sm:$0x3]
        %v201 = vunpack.c.l.b16 %v180
        %v202 = vunpack.c.l.b16 %v181
        %v203 = vunpack.c.l.b16 %v182
        %v204 = vunpack.c.l.b16 %v183
        %v205 = vunpack.c.l.b16 %v184
        %v206 = vunpack.c.l.b16 %v185
        %v207 = vunpack.c.l.b16 %v186
        %v208 = vunpack.c.l.b16 %v187
        %v209 = vpack.c.b16 %v202, %v201
        %v210 = vpack.c.b16 %v204, %v203
        %v211 = vpack.c.b16 %v206, %v205
        %v212 = vpack.c.b16 %v208, %v207
        %v218 = vunpack.c.l.b16 %v188
        %v219 = vunpack.c.l.b16 %v189
        %v220 = vunpack.c.l.b16 %v190
        %v221 = vunpack.c.l.b16 %v191
        %v222 = vunpack.c.l.b16 %v192
        %v223 = vpack.c.b16 %v219, %v218
        %v224 = vpack.c.b16 %v221, %v220
        %v225 = vpack.c.b16 %v222, %v222
        %vm228 = vcmask 293888
        %v230 = vsel %vm228, %v209, 0
        %v233 = vsel %vm228, %v210, 0
        %v236 = vsel %vm228, %v211, 0
        %v239 = vsel %vm228, %v212, 0
        %vm241 = vcmask 1041408
        %v243 = vsel %vm241, %v225, 0
        %245 = vmatprep.subr.bf16.mxu0 0
        %246 = vmatpush1.bf16.msra.mxu0 %v223
        %247 = vmatprep.subr.bf16.mxu0 0
        %248 = vmatpush1.bf16.msra.mxu0 %v224
        %249 = vmatprep.subr.bf16.mxu0 0
        %250 = vmatpush1.bf16.msra.mxu0 %v243
        %251 = vmatprep.subr.bf16.mxu0 0
        %252 = vmatpush1.bf16.msra.mxu0 0
        %253 = vmatprep.subr.bf16.mxu0 0
        %254 = vmatpush1.bf16.msra.mxu0 0
        %255 = vmatprep.subr.bf16.mxu0 0
        %256 = vmatpush1.bf16.msra.mxu0 0
        %257 = vmatprep.subr.bf16.mxu0 0
        %258 = vmatpush1.bf16.msra.mxu0 0
        %259 = vmatprep.subr.bf16.mxu0 0
        %260 = vmatpush1.bf16.msra.mxu0 0
        %261 = vmatprep.subr.bf16.mxu0 0
        %262 = vmatpush1.bf16.msra.mxu0 0
        %263 = vmatprep.subr.bf16.mxu0 0
        %264 = vmatpush1.bf16.msra.mxu0 0
        %265 = vmatprep.subr.bf16.mxu0 0
        %266 = vmatpush1.bf16.msra.mxu0 0
        %267 = vmatprep.subr.bf16.mxu0 0
        %268 = vmatpush1.bf16.msra.mxu0 0
        %269 = vmatprep.subr.bf16.mxu0 0
        %270 = vmatpush1.bf16.msra.mxu0 0
        %271 = vmatprep.subr.bf16.mxu0 0
        %272 = vmatpush1.bf16.msra.mxu0 0
        %273 = vmatprep.subr.bf16.mxu0 0
        %274 = vmatpush1.bf16.msra.mxu0 0
        %275 = vmatprep.subr.bf16.mxu0 0
        %276 = vmatpush1.bf16.msra.mxu0 0
        %277 = vmatprep.mubr.bf16.mxu0 0
        %278 = vmatmul.mubr.bf16.gmra.mrb[0].mxu0 %v230
        %v279 = vpop.f32.mrb[0].mxu0
        %v280 = vadd.f32 0.0, %v279
        %v281 = vpop.f32.mrb[0].mxu0
        %v282 = vpop.f32.mrb[0].mxu0
        %v283 = vadd.f32 0.0, %v282
        %v284 = vpop.f32.mrb[0].mxu0
        %285 = vmatprep.mubr.bf16.mxu0 0
        %286 = vmatmul.mubr.bf16.gmra.mrb[0].mxu0 %v233
        %v287 = vpop.f32.mrb[0].mxu0
        %v288 = vadd.f32 0.0, %v287
        %v289 = vpop.f32.mrb[0].mxu0
        %v290 = vpop.f32.mrb[0].mxu0
        %v291 = vadd.f32 0.0, %v290
        %v292 = vpop.f32.mrb[0].mxu0
        %293 = vmatprep.mubr.bf16.mxu0 0
        %294 = vmatmul.mubr.bf16.gmra.mrb[0].mxu0 %v236
        %v295 = vpop.f32.mrb[0].mxu0
        %v296 = vadd.f32 0.0, %v295
        %v297 = vpop.f32.mrb[0].mxu0
        %v298 = vpop.f32.mrb[0].mxu0
        %v299 = vadd.f32 0.0, %v298
        %v300 = vpop.f32.mrb[0].mxu0
        %301 = vmatprep.mubr.bf16.mxu0 0
        %302 = vmatmul.mubr.bf16.gmra.mrb[0].mxu0 %v239
        %v303 = vpop.f32.mrb[0].mxu0
        %v304 = vadd.f32 0.0, %v303
        %v305 = vpop.f32.mrb[0].mxu0
        %v306 = vpop.f32.mrb[0].mxu0
        %v307 = vadd.f32 0.0, %v306
        %v308 = vpop.f32.mrb[0].mxu0
        %309 = vdwg.mxu0
        %vm310 = vcmask 64512
        %311 = vst.msk [vmem:[%s171] sm:$0xff] %vm310, %v280
        %312 = vst.msk [vmem:[%s171 + $0x8] sm:$0xff] %vm310, %v283
        %313 = vst.msk [vmem:[%s171 + $0x10] sm:$0xff] %vm310, %v288
        %314 = vst.msk [vmem:[%s171 + $0x18] sm:$0xff] %vm310, %v291
        %315 = vst.msk [vmem:[%s171 + $0x20] sm:$0xff] %vm310, %v296
        %316 = vst.msk [vmem:[%s171 + $0x28] sm:$0xff] %vm310, %v299
        %317 = vst.msk [vmem:[%s171 + $0x30] sm:$0xff] %vm310, %v304
        %318 = vst.msk [vmem:[%s171 + $0x38] sm:$0xff] %vm310, %v307
        %v319 = vsel %vm310, %v280, 0.0
        %v320 = vsel %vm310, %v283, 0.0
        %v321 = vadd.f32 %v319, %v320
        %v322 = vsel %vm310, %v288, 0.0
        %v323 = vadd.f32 %v321, %v322
        %v324 = vsel %vm310, %v291, 0.0
        %v325 = vadd.f32 %v323, %v324
        %v326 = vsel %vm310, %v296, 0.0
        %v327 = vadd.f32 %v325, %v326
        %v328 = vsel %vm310, %v299, 0.0
        %v329 = vadd.f32 %v327, %v328
        %v330 = vsel %vm310, %v304, 0.0
        %v331 = vadd.f32 %v329, %v330
        %v332 = vsel %vm310, %v307, 0.0
        %v333 = vadd.f32 %v331, %v332
        %v334 = vrot.slane %v333, 4
        %v335 = vadd.f32 %v333, %v334
        %v336 = vrot.slane %v335, 2
        %v337 = vadd.f32 %v335, %v336
        %v338 = vrot.slane %v337, 1
        %v339 = vadd.f32 %v337, %v338
        %v340 = vmul.f32 %v280, %v280
        %v341 = vmul.f32 %v283, %v283
        %v342 = vmul.f32 %v288, %v288
        %v343 = vmul.f32 %v291, %v291
        %v344 = vmul.f32 %v296, %v296
        %v345 = vmul.f32 %v299, %v299
        %v346 = vmul.f32 %v304, %v304
        %v347 = vmul.f32 %v307, %v307
        %v348 = vsel %vm310, %v340, 0.0
        %v349 = vsel %vm310, %v341, 0.0
        %v350 = vadd.f32 %v348, %v349
        %v351 = vsel %vm310, %v342, 0.0
        %v352 = vadd.f32 %v350, %v351
        %v353 = vsel %vm310, %v343, 0.0
        %v354 = vadd.f32 %v352, %v353
        %v355 = vsel %vm310, %v344, 0.0
        %v356 = vadd.f32 %v354, %v355
        %v357 = vsel %vm310, %v345, 0.0
        %v358 = vadd.f32 %v356, %v357
        %v359 = vsel %vm310, %v346, 0.0
        %v360 = vadd.f32 %v358, %v359
        %v361 = vsel %vm310, %v347, 0.0
        %v362 = vadd.f32 %v360, %v361
        %v363 = vrot.slane %v362, 4
        %v364 = vadd.f32 %v362, %v363
        %v365 = vrot.slane %v364, 2
        %v366 = vadd.f32 %v364, %v365
        %v367 = vrot.slane %v366, 1
        %v368 = vadd.f32 %v366, %v367
        %v369 = vld [vmem:[#allocation2] sm:$0x3]
        %vm370 = vcmask 1040384
        %v371 = vsel %vm370, %v339, %v368
        %v372 = vadd.f32 %v369, %v371
        %vm373 = vcmask 58368
        %374 = vst.msk [vmem:[#allocation2] sm:$0x3] %vm373, %v372
        %s375 = smul.u32 8, %s16
        %p376 = scmp.lt.s32.totalorder %s375, 15
        %s377 = scalar_select %p376, %s375, 15
        %s378 = smul.addr %s377, 8
        %s379 = scalar_lea.vmem %s2, %s378
        // Predicated region
        $region33: #{tpu_custom_call.1} parent=27 // pred_check
          %p380 = pneg %p81
        $region34: #{tpu_custom_call.1} parent=27 // pred_check_branch
          %382 = sbr.rel (%p380) target = $region36
        $region35: #{tpu_custom_call.1} parent=27 // pred_region
          %s383 = smul.u32 8, %s16
        $region36: #{tpu_custom_call.1} parent=27 // pred_fallthru
          _
        // Predicated region
        $region37: #{tpu_custom_call.1} parent=27 // pred_check
          %p384 = pneg %p102
        $region38: #{tpu_custom_call.1} parent=27 // pred_check_branch
          %386 = sbr.rel (%p384) target = $region40
        $region39: #{tpu_custom_call.1} parent=27 // pred_region
          %s388 = ssub.s32 32, 32
          %389 = vsyncadd [#allocation3], %s388
          %s391 = sshll.u32 [#allocation2], 4
          %s392 = int_to_ptr.vmem [resolvable:$true] %s391
          %394 = dma.vmem_to_hbm [thread:$0]  %s392, 32, %s3, [#allocation3]
        $region40: #{tpu_custom_call.1} parent=27 // pred_fallthru
          _
        // Predicated region
        $region41: #{tpu_custom_call.1} parent=27 // pred_check
          %p395 = pneg %p102
        $region42: #{tpu_custom_call.1} parent=27 // pred_check_branch
          %397 = sbr.rel (%p395) target = $region44
        $region43: #{tpu_custom_call.1} parent=27 // pred_region
          %398 = dma.done [#allocation3], 32
        $region44: #{tpu_custom_call.1} parent=27 // pred_fallthru
          _
      $region28: #{tpu_custom_call.1} parent=5 // pred_fallthru
        _
      %p399 = scmp.le.s32.totalorder 2, %s11
      // Predicated region
      $region45: #{tpu_custom_call.1} parent=5 // pred_check
        %p400 = pneg %p399
      $region46: #{tpu_custom_call.1} parent=5 // pred_check_branch
        %402 = sbr.rel (%p400) target = $region48
      $region47: #{tpu_custom_call.1} parent=5 // pred_region
        %s403 = ssub.s32 %s11, 2
        // Predicated region
        $region49: #{tpu_custom_call.1} parent=47 // pred_check
          %p404 = pneg %p87
        $region50: #{tpu_custom_call.1} parent=47 // pred_check_branch
          %406 = sbr.rel (%p404) target = $region52
        $region51: #{tpu_custom_call.1} parent=47 // pred_region
          %s407 = smul.u32 8, %s17
          %p408 = scmp.lt.s32.totalorder %s407, 15
          %s409 = scalar_select %p408, %s407, 15
          %s410 = smul.addr %s409, 8
          %s411 = scalar_lea.vmem %s2, %s410
        $region52: #{tpu_custom_call.1} parent=47 // pred_fallthru
          _
      $region48: #{tpu_custom_call.1} parent=5 // pred_fallthru
        _
    $region6: #{tpu_custom_call.1} parent=1 // loop_footer
      %s15 = sadd.s32 1, %s11
    $region7: #{tpu_custom_call.1} parent=1 // loop_footer_branch
      %10 = sbr.rel target = $region3
    $region8: #{tpu_custom_call.1} parent=1 // loop_exit
      _
    %412 = vsyncpa [#allocation3], 1
    %s413 = scalar_lea.sflag [#allocation3], 1
    %414 = vsyncpa %s413, 1

</llo_original>
